<compile_context>
chip_gen: v7x
topology: tpu7x:2x2x1
jax: 0.10.0
libtpu: 0.0.40
codegen_flags: <defaults>
</compile_context>

<pallas_src>
import jax
import jax.numpy as jnp
from jax.experimental import pallas as pl
from jax.experimental.pallas import tpu as pltpu


def _round_up(x, m):
    return (x + m - 1) // m * m


def _leaky_relu(h):
    # LeakyReLU(0.2) as a single VPU max.
    return jnp.maximum(h, 0.2 * h)


def _features(x_ref, w1_ref, b1_ref, w2_ref):
    """conv1 (VPU FMAs) + LeakyReLU + conv2 (MXU, bf16 in / f32 acc).

    x_ref : (2C, TP) f32   pixels on lanes
    w1    : (F0, 2C) f32, b1: (F0, 1) f32
    w2    : (F1, F0) bf16
    returns h2 : (F1, TP) f32
    """
    cin = x_ref.shape[0]
    # K = 2C is tiny: broadcast FMAs on the VPU instead of an MXU matmul with
    # a nearly empty contraction dimension.
    acc = w1_ref[:, 0:1] * x_ref[0:1, :]
    for c in range(1, cin):
        acc = acc + w1_ref[:, c:c + 1] * x_ref[c:c + 1, :]
    h1 = _leaky_relu(acc + b1_ref[...])
    # Dominant FLOPs: (F1, F0) @ (F0, TP), bf16 inputs, f32 accumulation.
    h2 = jnp.dot(w2_ref[...], h1.astype(jnp.bfloat16),
                 preferred_element_type=jnp.float32)
    return h2


def _make_stats_kernel(p_true, tile_p):
    """Pass 1: per-channel sum / sum-of-squares of the conv2 output."""

    def kernel(x_ref, w1_ref, b1_ref, w2_ref, sum_ref, sumsq_ref):
        i = pl.program_id(0)

        @pl.when(i == 0)
        def _():
            sum_ref[...] = jnp.zeros_like(sum_ref)
            sumsq_ref[...] = jnp.zeros_like(sumsq_ref)

        h2 = _features(x_ref, w1_ref, b1_ref, w2_ref)             # (F1, TP)
        # Mask padded pixels so the BN statistics cover exactly P pixels.
        col = i * tile_p + jax.lax.broadcasted_iota(jnp.int32, (1, tile_p), 1)
        mask = (col < p_true).astype(jnp.float32)                 # (1, TP)
        hm = h2 * mask
        sum_ref[...] += jnp.sum(hm, axis=1, keepdims=True)        # (F1, 1)
        sumsq_ref[...] += jnp.sum(hm * h2, axis=1, keepdims=True)  # (F1, 1)

    return kernel


def _apply_kernel(x_ref, w1_ref, b1_ref, w2_ref, scale_ref, shift_ref,
                  w3_ref, b3_ref, o_ref):
    """Pass 2: recompute features, apply folded BN + LeakyReLU + conv3."""
    h2 = _features(x_ref, w1_ref, b1_ref, w2_ref)                 # (F1, TP)
    # BatchNorm folded to one FMA per element: scale = gamma*rsqrt(var+eps),
    # shift = beta - mean*scale (computed once between the two passes).
    h2 = _leaky_relu(h2 * scale_ref[...] + shift_ref[...])
    # conv3 (F1 -> 1): cross-sublane reduction; result stays lane-dense
    # (pixels on the 128-lane axis) so stores are unmasked full-lane writes.
    o = jnp.sum(h2 * w3_ref[...], axis=0, keepdims=True) + b3_ref[...]
    o_ref[...] = o.astype(o_ref.dtype)


def per_pixel_discriminator(x, y, params, *, tile_pixels=4096):
    """x, y: (N, C, H, W) float32 (NCHW). Returns (N, 1, H, W) float32."""
    w1, b1, w2, gamma, beta, w3, b3 = params
    n, c, h, w = x.shape
    p = n * h * w
    f1 = w2.shape[0]

    # NCHW -> (C, P) rows per input, stacked to (2C, P): channels on sublanes,
    # pixels on lanes.  No lane-sparse (P, 2) operand is ever materialized.
    def rows(a):
        return jnp.transpose(a, (1, 0, 2, 3)).reshape(a.shape[1], p)

    xt = jnp.concatenate([rows(x), rows(y)], axis=0)              # (2C, P)

    # Pixel tile: bounded VMEM footprint (few MiB at 4096 lanes), big enough
    # to amortize per-grid-step overhead; fits v7x's 64 MiB VMEM comfortably.
    tile_p = min(_round_up(p, 128), _round_up(tile_pixels, 128))
    p_pad = _round_up(p, tile_p)
    if p_pad != p:
        xt = jnp.pad(xt, ((0, 0), (0, p_pad - p)))
    grid = (p_pad // tile_p,)

    w2_bf16 = w2.astype(jnp.bfloat16)

    const2 = lambda i: (0, 0)
    pix_spec = pl.BlockSpec((xt.shape[0], tile_p), lambda i: (0, i))
    # Small parameters: constant index_map -> DMA'd once, stay VMEM-resident.
    w_specs = [
        pl.BlockSpec(w1.shape, const2),
        pl.BlockSpec(b1.shape, const2),
        pl.BlockSpec(w2_bf16.shape, const2),
    ]

    # ---- pass 1: BN statistics (pixel axis is a reduction -> arbitrary) ----
    ch_sum, ch_sumsq = pl.pallas_call(
        _make_stats_kernel(p, tile_p),
        out_shape=(jax.ShapeDtypeStruct((f1, 1), jnp.float32),
                   jax.ShapeDtypeStruct((f1, 1), jnp.float32)),
        grid=grid,
        in_specs=[pix_spec] + w_specs,
        out_specs=(pl.BlockSpec((f1, 1), const2),
                   pl.BlockSpec((f1, 1), const2)),
        compiler_params=pltpu.CompilerParams(
            dimension_semantics=("arbitrary",),
            vmem_limit_bytes=32 * 1024 * 1024),
    )(xt, w1, b1, w2_bf16)

    # Fold the BN affine into a single per-channel scale/shift (tiny (F1,1)
    # math between the two passes; biased variance, eps=1e-5 as in PyTorch).
    mean = ch_sum / p
    var = jnp.maximum(ch_sumsq / p - mean * mean, 0.0)
    scale = gamma * jax.lax.rsqrt(var + 1e-5)
    shift = beta - mean * scale

    # ---- pass 2: apply (independent pixel tiles -> parallel / megacore) ----
    out = pl.pallas_call(
        _apply_kernel,
        out_shape=jax.ShapeDtypeStruct((1, p_pad), jnp.float32),
        grid=grid,
        in_specs=[pix_spec] + w_specs + [
            pl.BlockSpec(scale.shape, const2),
            pl.BlockSpec(shift.shape, const2),
            pl.BlockSpec(w3.shape, const2),
            pl.BlockSpec(b3.shape, const2),
        ],
        out_specs=pl.BlockSpec((1, tile_p), lambda i: (0, i)),
        compiler_params=pltpu.CompilerParams(
            dimension_semantics=("parallel",),
            vmem_limit_bytes=32 * 1024 * 1024),
    )(xt, w1, b1, w2_bf16, scale, shift, w3, b3)

    # (1, P_pad) lane-dense slab -> (N, 1, H, W)
    return out[0, :p].reshape(n, h, w)[:, None, :, :]


def make_params(key, in_channels=1, features=(64, 128)):
    """Deterministic synthetic parameters (shapes mirror the PyTorch module).
    conv weights stored as (Cout, Cin); BN/conv3 vectors stored as columns."""
    c2 = in_channels * 2
    f0, f1 = features
    k1, k2, k3, k4, k5 = jax.random.split(key, 5)
    w1 = jax.random.normal(k1, (f0, c2), jnp.float32) * 0.2    # conv1 weight
    b1 = jax.random.normal(k2, (f0, 1), jnp.float32) * 0.05    # conv1 bias
    w2 = jax.random.normal(k3, (f1, f0), jnp.float32) * 0.1    # conv2 weight (no bias)
    gamma = jnp.ones((f1, 1), jnp.float32)                     # BN weight
    beta = jnp.zeros((f1, 1), jnp.float32)                     # BN bias
    w3 = jax.random.normal(k4, (f1, 1), jnp.float32) * 0.1     # conv3 weight (column)
    b3 = jax.random.normal(k5, (1, 1), jnp.float32) * 0.05     # conv3 bias
    return (w1, b1, w2, gamma, beta, w3, b3)


def _reference_forward(x, y, params):
    """Pure-JAX f32 reference with the PyTorch module's semantics."""
    w1, b1, w2, gamma, beta, w3, b3 = params
    n, c, h, w = x.shape
    xy = jnp.concatenate([x, y], axis=1)                        # (N, 2C, H, W)
    flat = jnp.transpose(xy, (0, 2, 3, 1)).reshape(-1, 2 * c)   # (P, 2C)
    h1 = flat @ w1.T + b1.reshape(1, -1)
    h1 = jnp.where(h1 > 0, h1, 0.2 * h1)
    h2 = h1 @ w2.T
    mean = jnp.mean(h2, axis=0)
    var = jnp.mean((h2 - mean) ** 2, axis=0)
    h2 = (h2 - mean) * jax.lax.rsqrt(var + 1e-5)
    h2 = h2 * gamma.reshape(1, -1) + beta.reshape(1, -1)
    h2 = jnp.where(h2 > 0, h2, 0.2 * h2)
    o = h2 @ w3 + b3.reshape(1, 1)                              # (P, 1)
    return jnp.transpose(o.reshape(n, h, w, 1), (0, 3, 1, 2))


if __name__ == "__main__":
    key = jax.random.PRNGKey(0)
    kx, ky, kp = jax.random.split(key, 3)

    N, C, H, W = 2, 1, 16, 16
    x = jax.random.normal(kx, (N, C, H, W), jnp.float32)
    y = jax.random.normal(ky, (N, C, H, W), jnp.float32)
    params = make_params(kp, in_channels=C, features=(64, 128))

    out = jax.block_until_ready(per_pixel_discriminator(x, y, params))
    assert out.shape == (N, 1, H, W), out.shape

    ref = jax.block_until_ready(_reference_forward(x, y, params))
    err = float(jnp.max(jnp.abs(out - ref)))
    assert err < 0.15, f"max abs error vs f32 reference: {err}"
    print("KERNEL_OK")
</pallas_src>

<mosaic_0001>
module attributes {stable_mosaic.version = 11 : i64} {
  func.func @kernel(%arg0: i32, %arg1: memref<2x512xf32, #tpu.memory_space<vmem>>, %arg2: memref<64x2xf32, #tpu.memory_space<vmem>>, %arg3: memref<64x1xf32, #tpu.memory_space<vmem>>, %arg4: memref<128x64xbf16, #tpu.memory_space<vmem>>, %arg5: memref<128x1xf32, #tpu.memory_space<vmem>>, %arg6: memref<128x1xf32, #tpu.memory_space<vmem>>) attributes {dimension_semantics = [#tpu.dimension_semantics<arbitrary>], iteration_bounds = array<i64: 1>, scalar_prefetch = 0 : i64, scratch_operands = 0 : i64, tpu.core_type = #tpu.core_type<tc>, window_params = [{transform_indices = @transform_0, window_bounds = array<i64: 2, 512>}, {pipeline_mode = #tpu.pipeline_mode<synchronous>, transform_indices = @transform_1, window_bounds = array<i64: 64, 2>}, {pipeline_mode = #tpu.pipeline_mode<synchronous>, transform_indices = @transform_2, window_bounds = array<i64: 64, 1>}, {pipeline_mode = #tpu.pipeline_mode<synchronous>, transform_indices = @transform_3, window_bounds = array<i64: 128, 64>}, {pipeline_mode = #tpu.pipeline_mode<synchronous>, transform_indices = @transform_4, window_bounds = array<i64: 128, 1>}, {pipeline_mode = #tpu.pipeline_mode<synchronous>, transform_indices = @transform_5, window_bounds = array<i64: 128, 1>}]} {
    %c0_i32 = arith.constant 0 : i32
    %0 = arith.cmpi eq, %arg0, %c0_i32 : i32
    %1 = arith.extui %0 : i1 to i32
    %c0_i32_0 = arith.constant 0 : i32
    %2 = arith.cmpi ne, %1, %c0_i32_0 : i32
    scf.if %2 {
      %cst_23 = arith.constant 0.000000e+00 : f32
      %44 = vector.broadcast %cst_23 : f32 to vector<128x1xf32>
      %c0_24 = arith.constant 0 : index
      %c0_25 = arith.constant 0 : index
      %45 = vector.load %arg5[%c0_24, %c0_25] : memref<128x1xf32, #tpu.memory_space<vmem>>, vector<128x1xf32>
      tpu.vector_store %arg5[%c0_24, %c0_25], %44 {strides = array<i32>} : memref<128x1xf32, #tpu.memory_space<vmem>>, vector<128x1xf32>,
      %cst_26 = arith.constant 0.000000e+00 : f32
      %46 = vector.broadcast %cst_26 : f32 to vector<128x1xf32>
      %c0_27 = arith.constant 0 : index
      %c0_28 = arith.constant 0 : index
      %47 = vector.load %arg6[%c0_27, %c0_28] : memref<128x1xf32, #tpu.memory_space<vmem>>, vector<128x1xf32>
      tpu.vector_store %arg6[%c0_27, %c0_28], %46 {strides = array<i32>} : memref<128x1xf32, #tpu.memory_space<vmem>>, vector<128x1xf32>,
    } else {
    }
    %c0 = arith.constant 0 : index
    %c0_1 = arith.constant 0 : index
    %3 = vector.load %arg2[%c0, %c0_1] : memref<64x2xf32, #tpu.memory_space<vmem>>, vector<64x1xf32>
    %c0_2 = arith.constant 0 : index
    %c0_3 = arith.constant 0 : index
    %4 = vector.load %arg1[%c0_2, %c0_3] : memref<2x512xf32, #tpu.memory_space<vmem>>, vector<1x512xf32>
    %5 = vector.broadcast %3 : vector<64x1xf32> to vector<64x512xf32>
    %6 = vector.broadcast %4 : vector<1x512xf32> to vector<64x512xf32>
    %7 = arith.mulf %5, %6 : vector<64x512xf32>
    %c0_4 = arith.constant 0 : index
    %c1 = arith.constant 1 : index
    %8 = vector.load %arg2[%c0_4, %c1] : memref<64x2xf32, #tpu.memory_space<vmem>>, vector<64x1xf32>
    %c1_5 = arith.constant 1 : index
    %c0_6 = arith.constant 0 : index
    %9 = vector.load %arg1[%c1_5, %c0_6] : memref<2x512xf32, #tpu.memory_space<vmem>>, vector<1x512xf32>
    %10 = vector.broadcast %8 : vector<64x1xf32> to vector<64x512xf32>
    %11 = vector.broadcast %9 : vector<1x512xf32> to vector<64x512xf32>
    %12 = arith.mulf %10, %11 : vector<64x512xf32>
    %13 = arith.addf %7, %12 : vector<64x512xf32>
    %c0_7 = arith.constant 0 : index
    %c0_8 = arith.constant 0 : index
    %14 = vector.load %arg3[%c0_7, %c0_8] : memref<64x1xf32, #tpu.memory_space<vmem>>, vector<64x1xf32>
    %15 = vector.broadcast %14 : vector<64x1xf32> to vector<64x512xf32>
    %16 = arith.addf %13, %15 : vector<64x512xf32>
    %cst = arith.constant 2.000000e-01 : f32
    %17 = vector.broadcast %cst : f32 to vector<64x512xf32>
    %18 = arith.mulf %17, %16 : vector<64x512xf32>
    %19 = arith.maximumf %16, %18 : vector<64x512xf32>
    %c0_9 = arith.constant 0 : index
    %c0_10 = arith.constant 0 : index
    %20 = vector.load %arg4[%c0_9, %c0_10] : memref<128x64xbf16, #tpu.memory_space<vmem>>, vector<128x64xbf16>
    %21 = arith.truncf %19 : vector<64x512xf32> to vector<64x512xbf16>
    %cst_11 = arith.constant dense<0.000000e+00> : vector<128x512xf32>
    %22 = tpu.matmul %20, %21, %cst_11 {dimension_numbers = #tpu.dot_dimension_numbers<[1], [0], [0], [1], [0, 0, 1, 1], [], []>} : vector<128x64xbf16>, vector<64x512xbf16>, vector<128x512xf32> -> vector<128x512xf32>
    %c512_i32 = arith.constant 512 : i32
    %23 = arith.muli %arg0, %c512_i32 : i32
    %24 = tpu.iota {dimensions = array<i32: 1>} : vector<1x512xi32>
    %25 = vector.broadcast %23 : i32 to vector<1x512xi32>
    %26 = arith.addi %25, %24 : vector<1x512xi32>
    %c512_i32_12 = arith.constant 512 : i32
    %27 = vector.broadcast %c512_i32_12 : i32 to vector<1x512xi32>
    %28 = arith.cmpi slt, %26, %27 : vector<1x512xi32>
    %29 = arith.extui %28 : vector<1x512xi1> to vector<1x512xi32>
    %30 = arith.sitofp %29 : vector<1x512xi32> to vector<1x512xf32>
    %31 = vector.broadcast %30 : vector<1x512xf32> to vector<128x512xf32>
    %32 = arith.mulf %22, %31 : vector<128x512xf32>
    %c0_13 = arith.constant 0 : index
    %c0_14 = arith.constant 0 : index
    %33 = vector.load %arg5[%c0_13, %c0_14] : memref<128x1xf32, #tpu.memory_space<vmem>>, vector<128x1xf32>
    %cst_15 = arith.constant dense<0.000000e+00> : vector<128xf32>
    %34 = vector.multi_reduction <add>, %32, %cst_15 [1] : vector<128x512xf32> to vector<128xf32>
    %35 = vector.shape_cast %34 : vector<128xf32> to vector<128x1xf32>
    %36 = arith.addf %33, %35 : vector<128x1xf32>
    %c0_16 = arith.constant 0 : index
    %c0_17 = arith.constant 0 : index
    %37 = vector.load %arg5[%c0_16, %c0_17] : memref<128x1xf32, #tpu.memory_space<vmem>>, vector<128x1xf32>
    tpu.vector_store %arg5[%c0_16, %c0_17], %36 {strides = array<i32>} : memref<128x1xf32, #tpu.memory_space<vmem>>, vector<128x1xf32>,
    %c0_18 = arith.constant 0 : index
    %c0_19 = arith.constant 0 : index
    %38 = vector.load %arg6[%c0_18, %c0_19] : memref<128x1xf32, #tpu.memory_space<vmem>>, vector<128x1xf32>
    %39 = arith.mulf %32, %22 : vector<128x512xf32>
    %cst_20 = arith.constant dense<0.000000e+00> : vector<128xf32>
    %40 = vector.multi_reduction <add>, %39, %cst_20 [1] : vector<128x512xf32> to vector<128xf32>
    %41 = vector.shape_cast %40 : vector<128xf32> to vector<128x1xf32>
    %42 = arith.addf %38, %41 : vector<128x1xf32>
    %c0_21 = arith.constant 0 : index
    %c0_22 = arith.constant 0 : index
    %43 = vector.load %arg6[%c0_21, %c0_22] : memref<128x1xf32, #tpu.memory_space<vmem>>, vector<128x1xf32>
    tpu.vector_store %arg6[%c0_21, %c0_22], %42 {strides = array<i32>} : memref<128x1xf32, #tpu.memory_space<vmem>>, vector<128x1xf32>,
    return
  }
  func.func @transform_0(%arg0: i32) -> (i32, i32) {
    %c0_i32 = arith.constant 0 : i32
    %c0_i32_0 = arith.constant 0 : i32
    return %c0_i32, %arg0 : i32, i32
  }
  func.func @transform_1(%arg0: i32) -> (i32, i32) {
    %c0_i32 = arith.constant 0 : i32
    %c0_i32_0 = arith.constant 0 : i32
    %c0_i32_1 = arith.constant 0 : i32
    return %c0_i32, %c0_i32_0 : i32, i32
  }
  func.func @transform_2(%arg0: i32) -> (i32, i32) {
    %c0_i32 = arith.constant 0 : i32
    %c0_i32_0 = arith.constant 0 : i32
    %c0_i32_1 = arith.constant 0 : i32
    return %c0_i32, %c0_i32_0 : i32, i32
  }
  func.func @transform_3(%arg0: i32) -> (i32, i32) {
    %c0_i32 = arith.constant 0 : i32
    %c0_i32_0 = arith.constant 0 : i32
    %c0_i32_1 = arith.constant 0 : i32
    return %c0_i32, %c0_i32_0 : i32, i32
  }
  func.func @transform_4(%arg0: i32) -> (i32, i32) {
    %c0_i32 = arith.constant 0 : i32
    %c0_i32_0 = arith.constant 0 : i32
    %c0_i32_1 = arith.constant 0 : i32
    return %c0_i32, %c0_i32_0 : i32, i32
  }
  func.func @transform_5(%arg0: i32) -> (i32, i32) {
    %c0_i32 = arith.constant 0 : i32
    %c0_i32_0 = arith.constant 0 : i32
    %c0_i32_1 = arith.constant 0 : i32
    return %c0_i32, %c0_i32_0 : i32, i32
  }
}

</mosaic_0001>

<llo_original>
// kernel: tpu_custom_call.1
$region0: #{tpu_custom_call.1}
  #allocation0 [shape = 'u32[]', space=smem, size = 0x4, offset = 0x4, fixed_abs, tag = 'smem constant byte address 0x4 - core index']
  #allocation1 [shape = 'u32[144,128]{1,0:T(1,128)}', space=vmem, size = 0x12000, scoped, tag = 'internal scratch']
  %s0 = inlined_call_operand.vmem [shape: f32[2,512], index: 0, kind: input, shape index: {}]
  %s1 = inlined_call_operand.vmem [shape: f32[64,2], index: 1, kind: input, shape index: {}]
  %s2 = inlined_call_operand.vmem [shape: f32[64,1], index: 2, kind: input, shape index: {}]
  %s3 = inlined_call_operand.vmem [shape: bf16[128,64], index: 3, kind: input, shape index: {}]
  %s4 = inlined_call_operand.vmem [shape: f32[128,1], index: 4, kind: output, shape index: {0}]
  %s5 = inlined_call_operand.vmem [shape: f32[128,1], index: 5, kind: output, shape index: {1}]
  %6 = xla_tuple %s4, %s5
  %s7 = sld [smem:[#allocation0]]
  $region38: #{tpu_custom_call.1} parent=0
    _
  %s9 = ssub.s32 1, %s7
  %s10 = scalar_select 0, %s9, %s7
  // Predicated region
  $region2: #{tpu_custom_call.1} parent=0 // pred_check
    _
  $region3: #{tpu_custom_call.1} parent=0 // pred_check_branch
    %12 = sbr.rel (0) target = $region5
  $region4: #{tpu_custom_call.1} parent=0 // pred_region
    _
  $region5: #{tpu_custom_call.1} parent=0 // pred_fallthru
    _
  // Predicated region
  $region6: #{tpu_custom_call.1} parent=0 // pred_check
    _
  $region7: #{tpu_custom_call.1} parent=0 // pred_check_branch
    %14 = sbr.rel (0) target = $region9
  $region8: #{tpu_custom_call.1} parent=0 // pred_region
    _
  $region9: #{tpu_custom_call.1} parent=0 // pred_fallthru
    _
  // Predicated region
  $region10: #{tpu_custom_call.1} parent=0 // pred_check
    _
  $region11: #{tpu_custom_call.1} parent=0 // pred_check_branch
    %16 = sbr.rel (0) target = $region13
  $region12: #{tpu_custom_call.1} parent=0 // pred_region
    _
  $region13: #{tpu_custom_call.1} parent=0 // pred_fallthru
    _
  // Predicated region
  $region14: #{tpu_custom_call.1} parent=0 // pred_check
    _
  $region15: #{tpu_custom_call.1} parent=0 // pred_check_branch
    %18 = sbr.rel (0) target = $region17
  $region16: #{tpu_custom_call.1} parent=0 // pred_region
    _
  $region17: #{tpu_custom_call.1} parent=0 // pred_fallthru
    _
  %p20 = scmp.eq.s32.totalorder 0, 0
  // Predicated region
  $region18: #{tpu_custom_call.1} parent=0 // pred_check
    %p21 = pneg %p20
  $region19: #{tpu_custom_call.1} parent=0 // pred_check_branch
    %23 = sbr.rel (%p21) target = $region21
  $region20: #{tpu_custom_call.1} parent=0 // pred_region
    %vm24 = vcmask 7168
    %25 = vst.msk [vmem:[%s4] sm:$0xff] %vm24, 0.0
    %26 = vst.msk [vmem:[%s4 + $0x8] sm:$0xff] %vm24, 0.0
    %27 = vst.msk [vmem:[%s4 + $0x10] sm:$0xff] %vm24, 0.0
    %28 = vst.msk [vmem:[%s4 + $0x18] sm:$0xff] %vm24, 0.0
    %29 = vst.msk [vmem:[%s4 + $0x20] sm:$0xff] %vm24, 0.0
    %30 = vst.msk [vmem:[%s4 + $0x28] sm:$0xff] %vm24, 0.0
    %31 = vst.msk [vmem:[%s4 + $0x30] sm:$0xff] %vm24, 0.0
    %32 = vst.msk [vmem:[%s4 + $0x38] sm:$0xff] %vm24, 0.0
    %33 = vst.msk [vmem:[%s4 + $0x40] sm:$0xff] %vm24, 0.0
    %34 = vst.msk [vmem:[%s4 + $0x48] sm:$0xff] %vm24, 0.0
    %35 = vst.msk [vmem:[%s4 + $0x50] sm:$0xff] %vm24, 0.0
    %36 = vst.msk [vmem:[%s4 + $0x58] sm:$0xff] %vm24, 0.0
    %37 = vst.msk [vmem:[%s4 + $0x60] sm:$0xff] %vm24, 0.0
    %38 = vst.msk [vmem:[%s4 + $0x68] sm:$0xff] %vm24, 0.0
    %39 = vst.msk [vmem:[%s4 + $0x70] sm:$0xff] %vm24, 0.0
    %40 = vst.msk [vmem:[%s4 + $0x78] sm:$0xff] %vm24, 0.0
    %41 = vst.msk [vmem:[%s5] sm:$0xff] %vm24, 0.0
    %42 = vst.msk [vmem:[%s5 + $0x8] sm:$0xff] %vm24, 0.0
    %43 = vst.msk [vmem:[%s5 + $0x10] sm:$0xff] %vm24, 0.0
    %44 = vst.msk [vmem:[%s5 + $0x18] sm:$0xff] %vm24, 0.0
    %45 = vst.msk [vmem:[%s5 + $0x20] sm:$0xff] %vm24, 0.0
    %46 = vst.msk [vmem:[%s5 + $0x28] sm:$0xff] %vm24, 0.0
    %47 = vst.msk [vmem:[%s5 + $0x30] sm:$0xff] %vm24, 0.0
    %48 = vst.msk [vmem:[%s5 + $0x38] sm:$0xff] %vm24, 0.0
    %49 = vst.msk [vmem:[%s5 + $0x40] sm:$0xff] %vm24, 0.0
    %50 = vst.msk [vmem:[%s5 + $0x48] sm:$0xff] %vm24, 0.0
    %51 = vst.msk [vmem:[%s5 + $0x50] sm:$0xff] %vm24, 0.0
    %52 = vst.msk [vmem:[%s5 + $0x58] sm:$0xff] %vm24, 0.0
    %53 = vst.msk [vmem:[%s5 + $0x60] sm:$0xff] %vm24, 0.0
    %54 = vst.msk [vmem:[%s5 + $0x68] sm:$0xff] %vm24, 0.0
    %55 = vst.msk [vmem:[%s5 + $0x70] sm:$0xff] %vm24, 0.0
    %56 = vst.msk [vmem:[%s5 + $0x78] sm:$0xff] %vm24, 0.0
  $region21: #{tpu_custom_call.1} parent=0 // pred_fallthru
    _
  %v57 = vld [vmem:[%s1] sm:$0xff]
  %v58 = vld [vmem:[%s1 + $0x8] sm:$0xff]
  %v59 = vld [vmem:[%s1 + $0x10] sm:$0xff]
  %v60 = vld [vmem:[%s1 + $0x18] sm:$0xff]
  %v61 = vld [vmem:[%s1 + $0x20] sm:$0xff]
  %v62 = vld [vmem:[%s1 + $0x28] sm:$0xff]
  %v63 = vld [vmem:[%s1 + $0x30] sm:$0xff]
  %v64 = vld [vmem:[%s1 + $0x38] sm:$0xff]
  %v65 = vld [vmem:[%s0] ss:$2 sm:$0xf]
  %67 = vset.pattern.permute.xlu0 0
  %68 = vperm.xlu0 %67, %v57
  %v69 = vpop.permute.xlu0 %68
  %72 = vset.pattern.permute.xlu0 0
  %73 = vperm.xlu0 %72, %v58
  %v74 = vpop.permute.xlu0 %73
  %77 = vset.pattern.permute.xlu0 0
  %78 = vperm.xlu0 %77, %v59
  %v79 = vpop.permute.xlu0 %78
  %82 = vset.pattern.permute.xlu0 0
  %83 = vperm.xlu0 %82, %v60
  %v84 = vpop.permute.xlu0 %83
  %87 = vset.pattern.permute.xlu0 0
  %88 = vperm.xlu0 %87, %v61
  %v89 = vpop.permute.xlu0 %88
  %92 = vset.pattern.permute.xlu0 0
  %93 = vperm.xlu0 %92, %v62
  %v94 = vpop.permute.xlu0 %93
  %97 = vset.pattern.permute.xlu0 0
  %98 = vperm.xlu0 %97, %v63
  %v99 = vpop.permute.xlu0 %98
  %102 = vset.pattern.permute.xlu0 0
  %103 = vperm.xlu0 %102, %v64
  %v104 = vpop.permute.xlu0 %103
  %v107 = vlaneseq
  %v108 = vshrl.u32 %v107, 7
  %v109 = vsub.s32 0, %v108
  %v110 = vrot.slane %v65, %v109
  %v111 = vlaneseq
  %v112 = vshrl.u32 %v111, 7
  %v113 = vsub.s32 1, %v112
  %v114 = vrot.slane %v65, %v113
  %v115 = vlaneseq
  %v116 = vshrl.u32 %v115, 7
  %v117 = vsub.s32 2, %v116
  %v118 = vrot.slane %v65, %v117
  %v119 = vlaneseq
  %v120 = vshrl.u32 %v119, 7
  %v121 = vsub.s32 3, %v120
  %v122 = vrot.slane %v65, %v121
  %v127 = vmul.f32 %v69, %v110
  %v128 = vmul.f32 %v69, %v114
  %v129 = vmul.f32 %v69, %v118
  %v130 = vmul.f32 %v69, %v122
  %v131 = vmul.f32 %v74, %v110
  %v132 = vmul.f32 %v74, %v114
  %v133 = vmul.f32 %v74, %v118
  %v134 = vmul.f32 %v74, %v122
  %v135 = vmul.f32 %v79, %v110
  %v136 = vmul.f32 %v79, %v114
  %v137 = vmul.f32 %v79, %v118
  %v138 = vmul.f32 %v79, %v122
  %v139 = vmul.f32 %v84, %v110
  %v140 = vmul.f32 %v84, %v114
  %v141 = vmul.f32 %v84, %v118
  %v142 = vmul.f32 %v84, %v122
  %v143 = vmul.f32 %v89, %v110
  %v144 = vmul.f32 %v89, %v114
  %v145 = vmul.f32 %v89, %v118
  %v146 = vmul.f32 %v89, %v122
  %v147 = vmul.f32 %v94, %v110
  %v148 = vmul.f32 %v94, %v114
  %v149 = vmul.f32 %v94, %v118
  %v150 = vmul.f32 %v94, %v122
  %v151 = vmul.f32 %v99, %v110
  %v152 = vmul.f32 %v99, %v114
  %v153 = vmul.f32 %v99, %v118
  %v154 = vmul.f32 %v99, %v122
  %v155 = vmul.f32 %v104, %v110
  %v156 = vmul.f32 %v104, %v114
  %v157 = vmul.f32 %v104, %v118
  %v158 = vmul.f32 %v104, %v122
  %s159 = scalar_lea.vmem %s0, 1
  %v160 = vld [vmem:[%s159] ss:$2 sm:$0xf]
  %161 = vset.pattern.permute.xlu0 1
  %162 = vperm.xlu0 %161, %v57
  %v163 = vpop.permute.xlu0 %162
  %165 = vset.pattern.permute.xlu0 1
  %166 = vperm.xlu0 %165, %v58
  %v167 = vpop.permute.xlu0 %166
  %169 = vset.pattern.permute.xlu0 1
  %170 = vperm.xlu0 %169, %v59
  %v171 = vpop.permute.xlu0 %170
  %173 = vset.pattern.permute.xlu0 1
  %174 = vperm.xlu0 %173, %v60
  %v175 = vpop.permute.xlu0 %174
  %177 = vset.pattern.permute.xlu0 1
  %178 = vperm.xlu0 %177, %v61
  %v179 = vpop.permute.xlu0 %178
  %181 = vset.pattern.permute.xlu0 1
  %182 = vperm.xlu0 %181, %v62
  %v183 = vpop.permute.xlu0 %182
  %185 = vset.pattern.permute.xlu0 1
  %186 = vperm.xlu0 %185, %v63
  %v187 = vpop.permute.xlu0 %186
  %189 = vset.pattern.permute.xlu0 1
  %190 = vperm.xlu0 %189, %v64
  %v191 = vpop.permute.xlu0 %190
  %v194 = vlaneseq
  %v195 = vshrl.u32 %v194, 7
  %v196 = vsub.s32 0, %v195
  %v197 = vrot.slane %v160, %v196
  %v198 = vlaneseq
  %v199 = vshrl.u32 %v198, 7
  %v200 = vsub.s32 1, %v199
  %v201 = vrot.slane %v160, %v200
  %v202 = vlaneseq
  %v203 = vshrl.u32 %v202, 7
  %v204 = vsub.s32 2, %v203
  %v205 = vrot.slane %v160, %v204
  %v206 = vlaneseq
  %v207 = vshrl.u32 %v206, 7
  %v208 = vsub.s32 3, %v207
  %v209 = vrot.slane %v160, %v208
  %v214 = vmul.f32 %v163, %v197
  %v215 = vmul.f32 %v163, %v201
  %v216 = vmul.f32 %v163, %v205
  %v217 = vmul.f32 %v163, %v209
  %v218 = vmul.f32 %v167, %v197
  %v219 = vmul.f32 %v167, %v201
  %v220 = vmul.f32 %v167, %v205
  %v221 = vmul.f32 %v167, %v209
  %v222 = vmul.f32 %v171, %v197
  %v223 = vmul.f32 %v171, %v201
  %v224 = vmul.f32 %v171, %v205
  %v225 = vmul.f32 %v171, %v209
  %v226 = vmul.f32 %v175, %v197
  %v227 = vmul.f32 %v175, %v201
  %v228 = vmul.f32 %v175, %v205
  %v229 = vmul.f32 %v175, %v209
  %v230 = vmul.f32 %v179, %v197
  %v231 = vmul.f32 %v179, %v201
  %v232 = vmul.f32 %v179, %v205
  %v233 = vmul.f32 %v179, %v209
  %v234 = vmul.f32 %v183, %v197
  %v235 = vmul.f32 %v183, %v201
  %v236 = vmul.f32 %v183, %v205
  %v237 = vmul.f32 %v183, %v209
  %v238 = vmul.f32 %v187, %v197
  %v239 = vmul.f32 %v187, %v201
  %v240 = vmul.f32 %v187, %v205
  %v241 = vmul.f32 %v187, %v209
  %v242 = vmul.f32 %v191, %v197
  %v243 = vmul.f32 %v191, %v201
  %v244 = vmul.f32 %v191, %v205
  %v245 = vmul.f32 %v191, %v209
  %v246 = vadd.f32 %v127, %v214
  %v247 = vadd.f32 %v128, %v215
  %v248 = vadd.f32 %v129, %v216
  %v249 = vadd.f32 %v130, %v217
  %v250 = vadd.f32 %v131, %v218
  %v251 = vadd.f32 %v132, %v219
  %v252 = vadd.f32 %v133, %v220
  %v253 = vadd.f32 %v134, %v221
  %v254 = vadd.f32 %v135, %v222
  %v255 = vadd.f32 %v136, %v223
  %v256 = vadd.f32 %v137, %v224
  %v257 = vadd.f32 %v138, %v225
  %v258 = vadd.f32 %v139, %v226
  %v259 = vadd.f32 %v140, %v227
  %v260 = vadd.f32 %v141, %v228
  %v261 = vadd.f32 %v142, %v229
  %v262 = vadd.f32 %v143, %v230
  %v263 = vadd.f32 %v144, %v231
  %v264 = vadd.f32 %v145, %v232
  %v265 = vadd.f32 %v146, %v233
  %v266 = vadd.f32 %v147, %v234
  %v267 = vadd.f32 %v148, %v235
  %v268 = vadd.f32 %v149, %v236
  %v269 = vadd.f32 %v150, %v237
  %v270 = vadd.f32 %v151, %v238
  %v271 = vadd.f32 %v152, %v239
  %v272 = vadd.f32 %v153, %v240
  %v273 = vadd.f32 %v154, %v241
  %v274 = vadd.f32 %v155, %v242
  %v275 = vadd.f32 %v156, %v243
  %v276 = vadd.f32 %v157, %v244
  %v277 = vadd.f32 %v158, %v245
  %v278 = vld [vmem:[%s2] sm:$0xff]
  %v279 = vld [vmem:[%s2 + $0x8] sm:$0xff]
  %v280 = vld [vmem:[%s2 + $0x10] sm:$0xff]
  %v281 = vld [vmem:[%s2 + $0x18] sm:$0xff]
  %v282 = vld [vmem:[%s2 + $0x20] sm:$0xff]
  %v283 = vld [vmem:[%s2 + $0x28] sm:$0xff]
  %v284 = vld [vmem:[%s2 + $0x30] sm:$0xff]
  %v285 = vld [vmem:[%s2 + $0x38] sm:$0xff]
  %287 = vset.pattern.permute.xlu0 0
  %288 = vperm.xlu0 %287, %v278
  %v289 = vpop.permute.xlu0 %288
  %292 = vset.pattern.permute.xlu0 0
  %293 = vperm.xlu0 %292, %v279
  %v294 = vpop.permute.xlu0 %293
  %297 = vset.pattern.permute.xlu0 0
  %298 = vperm.xlu0 %297, %v280
  %v299 = vpop.permute.xlu0 %298
  %302 = vset.pattern.permute.xlu0 0
  %303 = vperm.xlu0 %302, %v281
  %v304 = vpop.permute.xlu0 %303
  %307 = vset.pattern.permute.xlu0 0
  %308 = vperm.xlu0 %307, %v282
  %v309 = vpop.permute.xlu0 %308
  %312 = vset.pattern.permute.xlu0 0
  %313 = vperm.xlu0 %312, %v283
  %v314 = vpop.permute.xlu0 %313
  %317 = vset.pattern.permute.xlu0 0
  %318 = vperm.xlu0 %317, %v284
  %v319 = vpop.permute.xlu0 %318
  %322 = vset.pattern.permute.xlu0 0
  %323 = vperm.xlu0 %322, %v285
  %v324 = vpop.permute.xlu0 %323
  %v326 = vadd.f32 %v246, %v289
  %v327 = vadd.f32 %v247, %v289
  %v328 = vadd.f32 %v248, %v289
  %v329 = vadd.f32 %v249, %v289
  %v330 = vadd.f32 %v250, %v294
  %v331 = vadd.f32 %v251, %v294
  %v332 = vadd.f32 %v252, %v294
  %v333 = vadd.f32 %v253, %v294
  %v334 = vadd.f32 %v254, %v299
  %v335 = vadd.f32 %v255, %v299
  %v336 = vadd.f32 %v256, %v299
  %v337 = vadd.f32 %v257, %v299
  %v338 = vadd.f32 %v258, %v304
  %v339 = vadd.f32 %v259, %v304
  %v340 = vadd.f32 %v260, %v304
  %v341 = vadd.f32 %v261, %v304
  %v342 = vadd.f32 %v262, %v309
  %v343 = vadd.f32 %v263, %v309
  %v344 = vadd.f32 %v264, %v309
  %v345 = vadd.f32 %v265, %v309
  %v346 = vadd.f32 %v266, %v314
  %v347 = vadd.f32 %v267, %v314
  %v348 = vadd.f32 %v268, %v314
  %v349 = vadd.f32 %v269, %v314
  %v350 = vadd.f32 %v270, %v319
  %v351 = vadd.f32 %v271, %v319
  %v352 = vadd.f32 %v272, %v319
  %v353 = vadd.f32 %v273, %v319
  %v354 = vadd.f32 %v274, %v324
  %v355 = vadd.f32 %v275, %v324
  %v356 = vadd.f32 %v276, %v324
  %v357 = vadd.f32 %v277, %v324
  %v358 = vmul.f32 %v326, 0.2
  %v359 = vmul.f32 %v327, 0.2
  %v360 = vmul.f32 %v328, 0.2
  %v361 = vmul.f32 %v329, 0.2
  %v362 = vmul.f32 %v330, 0.2
  %v363 = vmul.f32 %v331, 0.2
  %v364 = vmul.f32 %v332, 0.2
  %v365 = vmul.f32 %v333, 0.2
  %v366 = vmul.f32 %v334, 0.2
  %v367 = vmul.f32 %v335, 0.2
  %v368 = vmul.f32 %v336, 0.2
  %v369 = vmul.f32 %v337, 0.2
  %v370 = vmul.f32 %v338, 0.2
  %v371 = vmul.f32 %v339, 0.2
  %v372 = vmul.f32 %v340, 0.2
  %v373 = vmul.f32 %v341, 0.2
  %v374 = vmul.f32 %v342, 0.2
  %v375 = vmul.f32 %v343, 0.2
  %v376 = vmul.f32 %v344, 0.2
  %v377 = vmul.f32 %v345, 0.2
  %v378 = vmul.f32 %v346, 0.2
  %v379 = vmul.f32 %v347, 0.2
  %v380 = vmul.f32 %v348, 0.2
  %v381 = vmul.f32 %v349, 0.2
  %v382 = vmul.f32 %v350, 0.2
  %v383 = vmul.f32 %v351, 0.2
  %v384 = vmul.f32 %v352, 0.2
  %v385 = vmul.f32 %v353, 0.2
  %v386 = vmul.f32 %v354, 0.2
  %v387 = vmul.f32 %v355, 0.2
  %v388 = vmul.f32 %v356, 0.2
  %v389 = vmul.f32 %v357, 0.2
  %v390 = vmax.f32 %v326, %v358
  %v391 = vmax.f32 %v327, %v359
  %v392 = vmax.f32 %v328, %v360
  %v393 = vmax.f32 %v329, %v361
  %v394 = vmax.f32 %v330, %v362
  %v395 = vmax.f32 %v331, %v363
  %v396 = vmax.f32 %v332, %v364
  %v397 = vmax.f32 %v333, %v365
  %v398 = vmax.f32 %v334, %v366
  %v399 = vmax.f32 %v335, %v367
  %v400 = vmax.f32 %v336, %v368
  %v401 = vmax.f32 %v337, %v369
  %v402 = vmax.f32 %v338, %v370
  %v403 = vmax.f32 %v339, %v371
  %v404 = vmax.f32 %v340, %v372
  %v405 = vmax.f32 %v341, %v373
  %v406 = vmax.f32 %v342, %v374
  %v407 = vmax.f32 %v343, %v375
  %v408 = vmax.f32 %v344, %v376
  %v409 = vmax.f32 %v345, %v377
  %v410 = vmax.f32 %v346, %v378
  %v411 = vmax.f32 %v347, %v379
  %v412 = vmax.f32 %v348, %v380
  %v413 = vmax.f32 %v349, %v381
  %v414 = vmax.f32 %v350, %v382
  %v415 = vmax.f32 %v351, %v383
  %v416 = vmax.f32 %v352, %v384
  %v417 = vmax.f32 %v353, %v385
  %v418 = vmax.f32 %v354, %v386
  %v419 = vmax.f32 %v355, %v387
  %v420 = vmax.f32 %v356, %v388
  %v421 = vmax.f32 %v357, %v389
  %v422 = vld [vmem:[%s3] sm:$0xf]
  %v423 = vld [vmem:[%s3 + $0x4] sm:$0xf]
  %v424 = vld [vmem:[%s3 + $0x8] sm:$0xf]
  %v425 = vld [vmem:[%s3 + $0xc] sm:$0xf]
  %v426 = vld [vmem:[%s3 + $0x10] sm:$0xf]
  %v427 = vld [vmem:[%s3 + $0x14] sm:$0xf]
  %v428 = vld [vmem:[%s3 + $0x18] sm:$0xf]
  %v429 = vld [vmem:[%s3 + $0x1c] sm:$0xf]
  %v430 = vld [vmem:[%s3 + $0x20] sm:$0xf]
  %v431 = vld [vmem:[%s3 + $0x24] sm:$0xf]
  %v432 = vld [vmem:[%s3 + $0x28] sm:$0xf]
  %v433 = vld [vmem:[%s3 + $0x2c] sm:$0xf]
  %v434 = vld [vmem:[%s3 + $0x30] sm:$0xf]
  %v435 = vld [vmem:[%s3 + $0x34] sm:$0xf]
  %v436 = vld [vmem:[%s3 + $0x38] sm:$0xf]
  %v437 = vld [vmem:[%s3 + $0x3c] sm:$0xf]
  %v438 = vpack.c.bf16 %v394, %v390
  %v439 = vpack.c.bf16 %v395, %v391
  %v440 = vpack.c.bf16 %v396, %v392
  %v441 = vpack.c.bf16 %v397, %v393
  %v442 = vpack.c.bf16 %v402, %v398
  %v443 = vpack.c.bf16 %v403, %v399
  %v444 = vpack.c.bf16 %v404, %v400
  %v445 = vpack.c.bf16 %v405, %v401
  %v446 = vpack.c.bf16 %v410, %v406
  %v447 = vpack.c.bf16 %v411, %v407
  %v448 = vpack.c.bf16 %v412, %v408
  %v449 = vpack.c.bf16 %v413, %v409
  %v450 = vpack.c.bf16 %v418, %v414
  %v451 = vpack.c.bf16 %v419, %v415
  %v452 = vpack.c.bf16 %v420, %v416
  %v453 = vpack.c.bf16 %v421, %v417
  %v470 = vunpack.c.l.b16 %v422
  %v471 = vunpack.c.l.b16 %v423
  %v472 = vunpack.c.l.b16 %v424
  %v473 = vunpack.c.l.b16 %v425
  %v474 = vunpack.c.l.b16 %v426
  %v475 = vunpack.c.l.b16 %v427
  %v476 = vunpack.c.l.b16 %v428
  %v477 = vunpack.c.l.b16 %v429
  %v478 = vunpack.c.l.b16 %v430
  %v479 = vunpack.c.l.b16 %v431
  %v480 = vunpack.c.l.b16 %v432
  %v481 = vunpack.c.l.b16 %v433
  %v482 = vunpack.c.l.b16 %v434
  %v483 = vunpack.c.l.b16 %v435
  %v484 = vunpack.c.l.b16 %v436
  %v485 = vunpack.c.l.b16 %v437
  %v486 = vpack.c.b16 %v471, %v470
  %v487 = vpack.c.b16 %v473, %v472
  %v488 = vpack.c.b16 %v475, %v474
  %v489 = vpack.c.b16 %v477, %v476
  %v490 = vpack.c.b16 %v479, %v478
  %v491 = vpack.c.b16 %v481, %v480
  %v492 = vpack.c.b16 %v483, %v482
  %v493 = vpack.c.b16 %v485, %v484
  %vm494 = vcmask 523264
  %v496 = vsel %vm494, %v486, 0
  %v499 = vsel %vm494, %v487, 0
  %v502 = vsel %vm494, %v488, 0
  %v505 = vsel %vm494, %v489, 0
  %v508 = vsel %vm494, %v490, 0
  %v511 = vsel %vm494, %v491, 0
  %v514 = vsel %vm494, %v492, 0
  %v517 = vsel %vm494, %v493, 0
  %519 = vmatprep.subr.bf16.mxu0 %v439
  %520 = vmatpush1.bf16.msra.mxu0 %v438
  %521 = vmatprep.subr.bf16.mxu0 %v443
  %522 = vmatpush1.bf16.msra.mxu0 %v442
  %523 = vmatprep.subr.bf16.mxu0 %v447
  %524 = vmatpush1.bf16.msra.mxu0 %v446
  %525 = vmatprep.subr.bf16.mxu0 %v451
  %526 = vmatpush1.bf16.msra.mxu0 %v450
  %527 = vmatprep.subr.bf16.mxu0 0
  %528 = vmatpush1.bf16.msra.mxu0 0
  %529 = vmatprep.subr.bf16.mxu0 0
  %530 = vmatpush1.bf16.msra.mxu0 0
  %531 = vmatprep.subr.bf16.mxu0 0
  %532 = vmatpush1.bf16.msra.mxu0 0
  %533 = vmatprep.subr.bf16.mxu0 0
  %534 = vmatpush1.bf16.msra.mxu0 0
  %535 = vmatprep.subr.bf16.mxu0 0
  %536 = vmatpush1.bf16.msra.mxu0 0
  %537 = vmatprep.subr.bf16.mxu0 0
  %538 = vmatpush1.bf16.msra.mxu0 0
  %539 = vmatprep.subr.bf16.mxu0 0
  %540 = vmatpush1.bf16.msra.mxu0 0
  %541 = vmatprep.subr.bf16.mxu0 0
  %542 = vmatpush1.bf16.msra.mxu0 0
  %543 = vmatprep.subr.bf16.mxu0 0
  %544 = vmatpush1.bf16.msra.mxu0 0
  %545 = vmatprep.subr.bf16.mxu0 0
  %546 = vmatpush1.bf16.msra.mxu0 0
  %547 = vmatprep.subr.bf16.mxu0 0
  %548 = vmatpush1.bf16.msra.mxu0 0
  %549 = vmatprep.subr.bf16.mxu0 0
  %550 = vmatpush1.bf16.msra.mxu0 0
  %551 = vmatprep.mubr.bf16.mxu0 0
  %552 = vmatmul.mubr.bf16.gmra.mrb[0].mxu0 %v496
  %v553 = vpop.f32.mrb[0].mxu0
  %v554 = vadd.f32 0.0, %v553
  %v555 = vpop.f32.mrb[0].mxu0
  %v556 = vadd.f32 0.0, %v555
  %v557 = vpop.f32.mrb[0].mxu0
  %v558 = vadd.f32 0.0, %v557
  %v559 = vpop.f32.mrb[0].mxu0
  %v560 = vadd.f32 0.0, %v559
  %561 = vmatprep.mubr.bf16.mxu0 0
  %562 = vmatmul.mubr.bf16.gmra.mrb[0].mxu0 %v499
  %v563 = vpop.f32.mrb[0].mxu0
  %v564 = vadd.f32 0.0, %v563
  %v565 = vpop.f32.mrb[0].mxu0
  %v566 = vadd.f32 0.0, %v565
  %v567 = vpop.f32.mrb[0].mxu0
  %v568 = vadd.f32 0.0, %v567
  %v569 = vpop.f32.mrb[0].mxu0
  %v570 = vadd.f32 0.0, %v569
  %571 = vmatprep.mubr.bf16.mxu0 0
  %572 = vmatmul.mubr.bf16.gmra.mrb[0].mxu0 %v502
  %v573 = vpop.f32.mrb[0].mxu0
  %v574 = vadd.f32 0.0, %v573
  %v575 = vpop.f32.mrb[0].mxu0
  %v576 = vadd.f32 0.0, %v575
  %v577 = vpop.f32.mrb[0].mxu0
  %v578 = vadd.f32 0.0, %v577
  %v579 = vpop.f32.mrb[0].mxu0
  %v580 = vadd.f32 0.0, %v579
  %581 = vmatprep.mubr.bf16.mxu0 0
  %582 = vmatmul.mubr.bf16.gmra.mrb[0].mxu0 %v505
  %v583 = vpop.f32.mrb[0].mxu0
  %v584 = vadd.f32 0.0, %v583
  %v585 = vpop.f32.mrb[0].mxu0
  %v586 = vadd.f32 0.0, %v585
  %v587 = vpop.f32.mrb[0].mxu0
  %v588 = vadd.f32 0.0, %v587
  %v589 = vpop.f32.mrb[0].mxu0
  %v590 = vadd.f32 0.0, %v589
  %591 = vmatprep.mubr.bf16.mxu0 0
  %592 = vmatmul.mubr.bf16.gmra.mrb[0].mxu0 %v508
  %v593 = vpop.f32.mrb[0].mxu0
  %v594 = vadd.f32 0.0, %v593
  %v595 = vpop.f32.mrb[0].mxu0
  %v596 = vadd.f32 0.0, %v595
  %v597 = vpop.f32.mrb[0].mxu0
  %v598 = vadd.f32 0.0, %v597
  %v599 = vpop.f32.mrb[0].mxu0
  %v600 = vadd.f32 0.0, %v599
  %601 = vmatprep.mubr.bf16.mxu0 0
  %602 = vmatmul.mubr.bf16.gmra.mrb[0].mxu0 %v511
  %v603 = vpop.f32.mrb[0].mxu0
  %v604 = vadd.f32 0.0, %v603
  %v605 = vpop.f32.mrb[0].mxu0
  %v606 = vadd.f32 0.0, %v605
  %v607 = vpop.f32.mrb[0].mxu0
  %v608 = vadd.f32 0.0, %v607
  %v609 = vpop.f32.mrb[0].mxu0
  %v610 = vadd.f32 0.0, %v609
  %611 = vmatprep.mubr.bf16.mxu0 0
  %612 = vmatmul.mubr.bf16.gmra.mrb[0].mxu0 %v514
  %v613 = vpop.f32.mrb[0].mxu0
  %v614 = vadd.f32 0.0, %v613
  %v615 = vpop.f32.mrb[0].mxu0
  %v616 = vadd.f32 0.0, %v615
  %v617 = vpop.f32.mrb[0].mxu0
  %v618 = vadd.f32 0.0, %v617
  %v619 = vpop.f32.mrb[0].mxu0
  %v620 = vadd.f32 0.0, %v619
  %621 = vmatprep.mubr.bf16.mxu0 0
  %622 = vmatmul.mubr.bf16.gmra.mrb[0].mxu0 %v517
  %v623 = vpop.f32.mrb[0].mxu0
  %v624 = vadd.f32 0.0, %v623
  %v625 = vpop.f32.mrb[0].mxu0
  %v626 = vadd.f32 0.0, %v625
  %v627 = vpop.f32.mrb[0].mxu0
  %v628 = vadd.f32 0.0, %v627
  %v629 = vpop.f32.mrb[0].mxu0
  %v630 = vadd.f32 0.0, %v629
  %631 = vdwg.mxu0
  %632 = vmatprep.subr.bf16.mxu0 %v441
  %633 = vmatpush1.bf16.msra.mxu0 %v440
  %634 = vmatprep.subr.bf16.mxu0 %v445
  %635 = vmatpush1.bf16.msra.mxu0 %v444
  %636 = vmatprep.subr.bf16.mxu0 %v449
  %637 = vmatpush1.bf16.msra.mxu0 %v448
  %638 = vmatprep.subr.bf16.mxu0 %v453
  %639 = vmatpush1.bf16.msra.mxu0 %v452
  %640 = vmatprep.subr.bf16.mxu0 0
  %641 = vmatpush1.bf16.msra.mxu0 0
  %642 = vmatprep.subr.bf16.mxu0 0
  %643 = vmatpush1.bf16.msra.mxu0 0
  %644 = vmatprep.subr.bf16.mxu0 0
  %645 = vmatpush1.bf16.msra.mxu0 0
  %646 = vmatprep.subr.bf16.mxu0 0
  %647 = vmatpush1.bf16.msra.mxu0 0
  %648 = vmatprep.subr.bf16.mxu0 0
  %649 = vmatpush1.bf16.msra.mxu0 0
  %650 = vmatprep.subr.bf16.mxu0 0
  %651 = vmatpush1.bf16.msra.mxu0 0
  %652 = vmatprep.subr.bf16.mxu0 0
  %653 = vmatpush1.bf16.msra.mxu0 0
  %654 = vmatprep.subr.bf16.mxu0 0
  %655 = vmatpush1.bf16.msra.mxu0 0
  %656 = vmatprep.subr.bf16.mxu0 0
  %657 = vmatpush1.bf16.msra.mxu0 0
  %658 = vmatprep.subr.bf16.mxu0 0
  %659 = vmatpush1.bf16.msra.mxu0 0
  %660 = vmatprep.subr.bf16.mxu0 0
  %661 = vmatpush1.bf16.msra.mxu0 0
  %662 = vmatprep.subr.bf16.mxu0 0
  %663 = vmatpush1.bf16.msra.mxu0 0
  %664 = vmatprep.mubr.bf16.mxu0 0
  %665 = vmatmul.mubr.bf16.gmra.mrb[0].mxu0 %v496
  %v666 = vpop.f32.mrb[0].mxu0
  %v667 = vadd.f32 0.0, %v666
  %v668 = vpop.f32.mrb[0].mxu0
  %v669 = vadd.f32 0.0, %v668
  %v670 = vpop.f32.mrb[0].mxu0
  %v671 = vadd.f32 0.0, %v670
  %v672 = vpop.f32.mrb[0].mxu0
  %v673 = vadd.f32 0.0, %v672
  %674 = vmatprep.mubr.bf16.mxu0 0
  %675 = vmatmul.mubr.bf16.gmra.mrb[0].mxu0 %v499
  %v676 = vpop.f32.mrb[0].mxu0
  %v677 = vadd.f32 0.0, %v676
  %v678 = vpop.f32.mrb[0].mxu0
  %v679 = vadd.f32 0.0, %v678
  %v680 = vpop.f32.mrb[0].mxu0
  %v681 = vadd.f32 0.0, %v680
  %v682 = vpop.f32.mrb[0].mxu0
  %v683 = vadd.f32 0.0, %v682
  %684 = vmatprep.mubr.bf16.mxu0 0
  %685 = vmatmul.mubr.bf16.gmra.mrb[0].mxu0 %v502
  %v686 = vpop.f32.mrb[0].mxu0
  %v687 = vadd.f32 0.0, %v686
  %v688 = vpop.f32.mrb[0].mxu0
  %v689 = vadd.f32 0.0, %v688
  %v690 = vpop.f32.mrb[0].mxu0
  %v691 = vadd.f32 0.0, %v690
  %v692 = vpop.f32.mrb[0].mxu0
  %v693 = vadd.f32 0.0, %v692
  %694 = vmatprep.mubr.bf16.mxu0 0
  %695 = vmatmul.mubr.bf16.gmra.mrb[0].mxu0 %v505
  %v696 = vpop.f32.mrb[0].mxu0
  %v697 = vadd.f32 0.0, %v696
  %v698 = vpop.f32.mrb[0].mxu0
  %v699 = vadd.f32 0.0, %v698
  %v700 = vpop.f32.mrb[0].mxu0
  %v701 = vadd.f32 0.0, %v700
  %v702 = vpop.f32.mrb[0].mxu0
  %v703 = vadd.f32 0.0, %v702
  %704 = vmatprep.mubr.bf16.mxu0 0
  %705 = vmatmul.mubr.bf16.gmra.mrb[0].mxu0 %v508
  %v706 = vpop.f32.mrb[0].mxu0
  %v707 = vadd.f32 0.0, %v706
  %v708 = vpop.f32.mrb[0].mxu0
  %v709 = vadd.f32 0.0, %v708
  %v710 = vpop.f32.mrb[0].mxu0
  %v711 = vadd.f32 0.0, %v710
  %v712 = vpop.f32.mrb[0].mxu0
  %v713 = vadd.f32 0.0, %v712
  %714 = vmatprep.mubr.bf16.mxu0 0
  %715 = vmatmul.mubr.bf16.gmra.mrb[0].mxu0 %v511
  %v716 = vpop.f32.mrb[0].mxu0
  %v717 = vadd.f32 0.0, %v716
  %v718 = vpop.f32.mrb[0].mxu0
  %v719 = vadd.f32 0.0, %v718
  %v720 = vpop.f32.mrb[0].mxu0
  %v721 = vadd.f32 0.0, %v720
  %v722 = vpop.f32.mrb[0].mxu0
  %v723 = vadd.f32 0.0, %v722
  %724 = vmatprep.mubr.bf16.mxu0 0
  %725 = vmatmul.mubr.bf16.gmra.mrb[0].mxu0 %v514
  %v726 = vpop.f32.mrb[0].mxu0
  %v727 = vadd.f32 0.0, %v726
  %v728 = vpop.f32.mrb[0].mxu0
  %v729 = vadd.f32 0.0, %v728
  %v730 = vpop.f32.mrb[0].mxu0
  %v731 = vadd.f32 0.0, %v730
  %v732 = vpop.f32.mrb[0].mxu0
  %v733 = vadd.f32 0.0, %v732
  %734 = vmatprep.mubr.bf16.mxu0 0
  %735 = vmatmul.mubr.bf16.gmra.mrb[0].mxu0 %v517
  %v736 = vpop.f32.mrb[0].mxu0
  %v737 = vadd.f32 0.0, %v736
  %v738 = vpop.f32.mrb[0].mxu0
  %v739 = vadd.f32 0.0, %v738
  %v740 = vpop.f32.mrb[0].mxu0
  %v741 = vadd.f32 0.0, %v740
  %v742 = vpop.f32.mrb[0].mxu0
  %v743 = vadd.f32 0.0, %v742
  %744 = vdwg.mxu0
  %s745 = smul.u32 0, 512
  %v746 = vlaneseq
  %v747 = vand.u32 %v746, 127
  %v748 = vadd.s32 %v747, 128
  %v749 = vadd.s32 %v747, 256
  %v750 = vadd.s32 %v747, 384
  %v751 = vstv %s745
  %v752 = vadd.s32 %v751, %v747
  %v753 = vadd.s32 %v751, %v748
  %v754 = vadd.s32 %v751, %v749
  %v755 = vadd.s32 %v751, %v750
  %vm756 = vcmp.lt.s32.totalorder %v752, 512
  %vm757 = vcmp.lt.s32.totalorder %v753, 512
  %vm758 = vcmp.lt.s32.totalorder %v754, 512
  %vm759 = vcmp.lt.s32.totalorder %v755, 512
  %v760 = vsel %vm756, 1, 0
  %v761 = vsel %vm757, 1, 0
  %v762 = vsel %vm758, 1, 0
  %v763 = vsel %vm759, 1, 0
  %v764 = vcvt.s32.f32 %v760
  %v765 = vcvt.s32.f32 %v761
  %v766 = vcvt.s32.f32 %v762
  %v767 = vcvt.s32.f32 %v763
  %v768 = vmul.f32 %v554, %v764
  %v769 = vmul.f32 %v556, %v765
  %v770 = vmul.f32 %v667, %v766
  %v771 = vmul.f32 %v669, %v767
  %v772 = vmul.f32 %v558, %v764
  %v773 = vmul.f32 %v560, %v765
  %v774 = vmul.f32 %v671, %v766
  %v775 = vmul.f32 %v673, %v767
  %v776 = vmul.f32 %v564, %v764
  %v777 = vmul.f32 %v566, %v765
  %v778 = vmul.f32 %v677, %v766
  %v779 = vmul.f32 %v679, %v767
  %v780 = vmul.f32 %v568, %v764
  %v781 = vmul.f32 %v570, %v765
  %v782 = vmul.f32 %v681, %v766
  %v783 = vmul.f32 %v683, %v767
  %v784 = vmul.f32 %v574, %v764
  %v785 = vmul.f32 %v576, %v765
  %v786 = vmul.f32 %v687, %v766
  %v787 = vmul.f32 %v689, %v767
  %v788 = vmul.f32 %v578, %v764
  %v789 = vmul.f32 %v580, %v765
  %v790 = vmul.f32 %v691, %v766
  %v791 = vmul.f32 %v693, %v767
  %v792 = vmul.f32 %v584, %v764
  %v793 = vmul.f32 %v586, %v765
  %v794 = vmul.f32 %v697, %v766
  %v795 = vmul.f32 %v699, %v767
  %v796 = vmul.f32 %v588, %v764
  %v797 = vmul.f32 %v590, %v765
  %v798 = vmul.f32 %v701, %v766
  %v799 = vmul.f32 %v703, %v767
  %v800 = vmul.f32 %v594, %v764
  %v801 = vmul.f32 %v596, %v765
  %v802 = vmul.f32 %v707, %v766
  %v803 = vmul.f32 %v709, %v767
  %v804 = vmul.f32 %v598, %v764
  %v805 = vmul.f32 %v600, %v765
  %v806 = vmul.f32 %v711, %v766
  %v807 = vmul.f32 %v713, %v767
  %v808 = vmul.f32 %v604, %v764
  %v809 = vmul.f32 %v606, %v765
  %v810 = vmul.f32 %v717, %v766
  %v811 = vmul.f32 %v719, %v767
  %v812 = vmul.f32 %v608, %v764
  %v813 = vmul.f32 %v610, %v765
  %v814 = vmul.f32 %v721, %v766
  %v815 = vmul.f32 %v723, %v767
  %v816 = vmul.f32 %v614, %v764
  %v817 = vmul.f32 %v616, %v765
  %v818 = vmul.f32 %v727, %v766
  %v819 = vmul.f32 %v729, %v767
  %v820 = vmul.f32 %v618, %v764
  %v821 = vmul.f32 %v620, %v765
  %v822 = vmul.f32 %v731, %v766
  %v823 = vmul.f32 %v733, %v767
  %v824 = vmul.f32 %v624, %v764
  %v825 = vmul.f32 %v626, %v765
  %v826 = vmul.f32 %v737, %v766
  %v827 = vmul.f32 %v739, %v767
  %v828 = vmul.f32 %v628, %v764
  %v829 = vmul.f32 %v630, %v765
  %v830 = vmul.f32 %v741, %v766
  %v831 = vmul.f32 %v743, %v767
  %v832 = vld [vmem:[%s4] sm:$0xff]
  %v833 = vld [vmem:[%s4 + $0x8] sm:$0xff]
  %v834 = vld [vmem:[%s4 + $0x10] sm:$0xff]
  %v835 = vld [vmem:[%s4 + $0x18] sm:$0xff]
  %v836 = vld [vmem:[%s4 + $0x20] sm:$0xff]
  %v837 = vld [vmem:[%s4 + $0x28] sm:$0xff]
  %v838 = vld [vmem:[%s4 + $0x30] sm:$0xff]
  %v839 = vld [vmem:[%s4 + $0x38] sm:$0xff]
  %v840 = vld [vmem:[%s4 + $0x40] sm:$0xff]
  %v841 = vld [vmem:[%s4 + $0x48] sm:$0xff]
  %v842 = vld [vmem:[%s4 + $0x50] sm:$0xff]
  %v843 = vld [vmem:[%s4 + $0x58] sm:$0xff]
  %v844 = vld [vmem:[%s4 + $0x60] sm:$0xff]
  %v845 = vld [vmem:[%s4 + $0x68] sm:$0xff]
  %v846 = vld [vmem:[%s4 + $0x70] sm:$0xff]
  %v847 = vld [vmem:[%s4 + $0x78] sm:$0xff]
  %v848 = vadd.f32 %v768, %v769
  %v849 = vadd.f32 %v848, %v770
  %v850 = vadd.f32 %v849, %v771
  %851 = vadd.xlane.f32.xlu0 %v850
  %v852 = vpop.xlane.xlu0 %851
  %v853 = vadd.f32 %v772, %v773
  %v854 = vadd.f32 %v853, %v774
  %v855 = vadd.f32 %v854, %v775
  %856 = vadd.xlane.f32.xlu0 %v855
  %v857 = vpop.xlane.xlu0 %856
  %v858 = vadd.f32 %v776, %v777
  %v859 = vadd.f32 %v858, %v778
  %v860 = vadd.f32 %v859, %v779
  %861 = vadd.xlane.f32.xlu0 %v860
  %v862 = vpop.xlane.xlu0 %861
  %v863 = vadd.f32 %v780, %v781
  %v864 = vadd.f32 %v863, %v782
  %v865 = vadd.f32 %v864, %v783
  %866 = vadd.xlane.f32.xlu0 %v865
  %v867 = vpop.xlane.xlu0 %866
  %v868 = vadd.f32 %v784, %v785
  %v869 = vadd.f32 %v868, %v786
  %v870 = vadd.f32 %v869, %v787
  %871 = vadd.xlane.f32.xlu0 %v870
  %v872 = vpop.xlane.xlu0 %871
  %v873 = vadd.f32 %v788, %v789
  %v874 = vadd.f32 %v873, %v790
  %v875 = vadd.f32 %v874, %v791
  %876 = vadd.xlane.f32.xlu0 %v875
  %v877 = vpop.xlane.xlu0 %876
  %v878 = vadd.f32 %v792, %v793
  %v879 = vadd.f32 %v878, %v794
  %v880 = vadd.f32 %v879, %v795
  %881 = vadd.xlane.f32.xlu0 %v880
  %v882 = vpop.xlane.xlu0 %881
  %v883 = vadd.f32 %v796, %v797
  %v884 = vadd.f32 %v883, %v798
  %v885 = vadd.f32 %v884, %v799
  %886 = vadd.xlane.f32.xlu0 %v885
  %v887 = vpop.xlane.xlu0 %886
  %v888 = vadd.f32 %v800, %v801
  %v889 = vadd.f32 %v888, %v802
  %v890 = vadd.f32 %v889, %v803
  %891 = vadd.xlane.f32.xlu0 %v890
  %v892 = vpop.xlane.xlu0 %891
  %v893 = vadd.f32 %v804, %v805
  %v894 = vadd.f32 %v893, %v806
  %v895 = vadd.f32 %v894, %v807
  %896 = vadd.xlane.f32.xlu0 %v895
  %v897 = vpop.xlane.xlu0 %896
  %v898 = vadd.f32 %v808, %v809
  %v899 = vadd.f32 %v898, %v810
  %v900 = vadd.f32 %v899, %v811
  %901 = vadd.xlane.f32.xlu0 %v900
  %v902 = vpop.xlane.xlu0 %901
  %v903 = vadd.f32 %v812, %v813
  %v904 = vadd.f32 %v903, %v814
  %v905 = vadd.f32 %v904, %v815
  %906 = vadd.xlane.f32.xlu0 %v905
  %v907 = vpop.xlane.xlu0 %906
  %v908 = vadd.f32 %v816, %v817
  %v909 = vadd.f32 %v908, %v818
  %v910 = vadd.f32 %v909, %v819
  %911 = vadd.xlane.f32.xlu0 %v910
  %v912 = vpop.xlane.xlu0 %911
  %v913 = vadd.f32 %v820, %v821
  %v914 = vadd.f32 %v913, %v822
  %v915 = vadd.f32 %v914, %v823
  %916 = vadd.xlane.f32.xlu0 %v915
  %v917 = vpop.xlane.xlu0 %916
  %v918 = vadd.f32 %v824, %v825
  %v919 = vadd.f32 %v918, %v826
  %v920 = vadd.f32 %v919, %v827
  %921 = vadd.xlane.f32.xlu0 %v920
  %v922 = vpop.xlane.xlu0 %921
  %v923 = vadd.f32 %v828, %v829
  %v924 = vadd.f32 %v923, %v830
  %v925 = vadd.f32 %v924, %v831
  %926 = vadd.xlane.f32.xlu0 %v925
  %v927 = vpop.xlane.xlu0 %926
  %v928 = vadd.f32 %v832, %v852
  %v929 = vadd.f32 %v833, %v857
  %v930 = vadd.f32 %v834, %v862
  %v931 = vadd.f32 %v835, %v867
  %v932 = vadd.f32 %v836, %v872
  %v933 = vadd.f32 %v837, %v877
  %v934 = vadd.f32 %v838, %v882
  %v935 = vadd.f32 %v839, %v887
  %v936 = vadd.f32 %v840, %v892
  %v937 = vadd.f32 %v841, %v897
  %v938 = vadd.f32 %v842, %v902
  %v939 = vadd.f32 %v843, %v907
  %v940 = vadd.f32 %v844, %v912
  %v941 = vadd.f32 %v845, %v917
  %v942 = vadd.f32 %v846, %v922
  %v943 = vadd.f32 %v847, %v927
  %vm944 = vcmask 7168
  %945 = vst.msk [vmem:[%s4] sm:$0xff] %vm944, %v928
  %946 = vst.msk [vmem:[%s4 + $0x8] sm:$0xff] %vm944, %v929
  %947 = vst.msk [vmem:[%s4 + $0x10] sm:$0xff] %vm944, %v930
  %948 = vst.msk [vmem:[%s4 + $0x18] sm:$0xff] %vm944, %v931
  %949 = vst.msk [vmem:[%s4 + $0x20] sm:$0xff] %vm944, %v932
  %950 = vst.msk [vmem:[%s4 + $0x28] sm:$0xff] %vm944, %v933
  %951 = vst.msk [vmem:[%s4 + $0x30] sm:$0xff] %vm944, %v934
  %952 = vst.msk [vmem:[%s4 + $0x38] sm:$0xff] %vm944, %v935
  %953 = vst.msk [vmem:[%s4 + $0x40] sm:$0xff] %vm944, %v936
  %954 = vst.msk [vmem:[%s4 + $0x48] sm:$0xff] %vm944, %v937
  %955 = vst.msk [vmem:[%s4 + $0x50] sm:$0xff] %vm944, %v938
  %956 = vst.msk [vmem:[%s4 + $0x58] sm:$0xff] %vm944, %v939
  %957 = vst.msk [vmem:[%s4 + $0x60] sm:$0xff] %vm944, %v940
  %958 = vst.msk [vmem:[%s4 + $0x68] sm:$0xff] %vm944, %v941
  %959 = vst.msk [vmem:[%s4 + $0x70] sm:$0xff] %vm944, %v942
  %960 = vst.msk [vmem:[%s4 + $0x78] sm:$0xff] %vm944, %v943
  %v961 = vld [vmem:[%s5] sm:$0xff]
  %v962 = vld [vmem:[%s5 + $0x8] sm:$0xff]
  %v963 = vld [vmem:[%s5 + $0x10] sm:$0xff]
  %v964 = vld [vmem:[%s5 + $0x18] sm:$0xff]
  %v965 = vld [vmem:[%s5 + $0x20] sm:$0xff]
  %v966 = vld [vmem:[%s5 + $0x28] sm:$0xff]
  %v967 = vld [vmem:[%s5 + $0x30] sm:$0xff]
  %v968 = vld [vmem:[%s5 + $0x38] sm:$0xff]
  %v969 = vld [vmem:[%s5 + $0x40] sm:$0xff]
  %v970 = vld [vmem:[%s5 + $0x48] sm:$0xff]
  %v971 = vld [vmem:[%s5 + $0x50] sm:$0xff]
  %v972 = vld [vmem:[%s5 + $0x58] sm:$0xff]
  %v973 = vld [vmem:[%s5 + $0x60] sm:$0xff]
  %v974 = vld [vmem:[%s5 + $0x68] sm:$0xff]
  %v975 = vld [vmem:[%s5 + $0x70] sm:$0xff]
  %v976 = vld [vmem:[%s5 + $0x78] sm:$0xff]
  %v977 = vmul.f32 %v768, %v554
  %v978 = vmul.f32 %v769, %v556
  %v979 = vmul.f32 %v770, %v667
  %v980 = vmul.f32 %v771, %v669
  %v981 = vmul.f32 %v772, %v558
  %v982 = vmul.f32 %v773, %v560
  %v983 = vmul.f32 %v774, %v671
  %v984 = vmul.f32 %v775, %v673
  %v985 = vmul.f32 %v776, %v564
  %v986 = vmul.f32 %v777, %v566
  %v987 = vmul.f32 %v778, %v677
  %v988 = vmul.f32 %v779, %v679
  %v989 = vmul.f32 %v780, %v568
  %v990 = vmul.f32 %v781, %v570
  %v991 = vmul.f32 %v782, %v681
  %v992 = vmul.f32 %v783, %v683
  %v993 = vmul.f32 %v784, %v574
  %v994 = vmul.f32 %v785, %v576
  %v995 = vmul.f32 %v786, %v687
  %v996 = vmul.f32 %v787, %v689
  %v997 = vmul.f32 %v788, %v578
  %v998 = vmul.f32 %v789, %v580
  %v999 = vmul.f32 %v790, %v691
  %v1000 = vmul.f32 %v791, %v693
  %v1001 = vmul.f32 %v792, %v584
  %v1002 = vmul.f32 %v793, %v586
  %v1003 = vmul.f32 %v794, %v697
  %v1004 = vmul.f32 %v795, %v699
  %v1005 = vmul.f32 %v796, %v588
  %v1006 = vmul.f32 %v797, %v590
  %v1007 = vmul.f32 %v798, %v701
  %v1008 = vmul.f32 %v799, %v703
  %v1009 = vmul.f32 %v800, %v594
  %v1010 = vmul.f32 %v801, %v596
  %v1011 = vmul.f32 %v802, %v707
  %v1012 = vmul.f32 %v803, %v709
  %v1013 = vmul.f32 %v804, %v598
  %v1014 = vmul.f32 %v805, %v600
  %v1015 = vmul.f32 %v806, %v711
  %v1016 = vmul.f32 %v807, %v713
  %v1017 = vmul.f32 %v808, %v604
  %v1018 = vmul.f32 %v809, %v606
  %v1019 = vmul.f32 %v810, %v717
  %v1020 = vmul.f32 %v811, %v719
  %v1021 = vmul.f32 %v812, %v608
  %v1022 = vmul.f32 %v813, %v610
  %v1023 = vmul.f32 %v814, %v721
  %v1024 = vmul.f32 %v815, %v723
  %v1025 = vmul.f32 %v816, %v614
  %v1026 = vmul.f32 %v817, %v616
  %v1027 = vmul.f32 %v818, %v727
  %v1028 = vmul.f32 %v819, %v729
  %v1029 = vmul.f32 %v820, %v618
  %v1030 = vmul.f32 %v821, %v620
  %v1031 = vmul.f32 %v822, %v731
  %v1032 = vmul.f32 %v823, %v733
  %v1033 = vmul.f32 %v824, %v624
  %v1034 = vmul.f32 %v825, %v626
  %v1035 = vmul.f32 %v826, %v737
  %v1036 = vmul.f32 %v827, %v739
  %v1037 = vmul.f32 %v828, %v628
  %v1038 = vmul.f32 %v829, %v630
  %v1039 = vmul.f32 %v830, %v741
  %v1040 = vmul.f32 %v831, %v743
  %v1041 = vadd.f32 %v977, %v978
  %v1042 = vadd.f32 %v1041, %v979
  %v1043 = vadd.f32 %v1042, %v980
  %1044 = vadd.xlane.f32.xlu0 %v1043
  %v1045 = vpop.xlane.xlu0 %1044
  %v1046 = vadd.f32 %v981, %v982
  %v1047 = vadd.f32 %v1046, %v983
  %v1048 = vadd.f32 %v1047, %v984
  %1049 = vadd.xlane.f32.xlu0 %v1048
  %v1050 = vpop.xlane.xlu0 %1049
  %v1051 = vadd.f32 %v985, %v986
  %v1052 = vadd.f32 %v1051, %v987
  %v1053 = vadd.f32 %v1052, %v988
  %1054 = vadd.xlane.f32.xlu0 %v1053
  %v1055 = vpop.xlane.xlu0 %1054
  %v1056 = vadd.f32 %v989, %v990
  %v1057 = vadd.f32 %v1056, %v991
  %v1058 = vadd.f32 %v1057, %v992
  %1059 = vadd.xlane.f32.xlu0 %v1058
  %v1060 = vpop.xlane.xlu0 %1059
  %v1061 = vadd.f32 %v993, %v994
  %v1062 = vadd.f32 %v1061, %v995
  %v1063 = vadd.f32 %v1062, %v996
  %1064 = vadd.xlane.f32.xlu0 %v1063
  %v1065 = vpop.xlane.xlu0 %1064
  %v1066 = vadd.f32 %v997, %v998
  %v1067 = vadd.f32 %v1066, %v999
  %v1068 = vadd.f32 %v1067, %v1000
  %1069 = vadd.xlane.f32.xlu0 %v1068
  %v1070 = vpop.xlane.xlu0 %1069
  %v1071 = vadd.f32 %v1001, %v1002
  %v1072 = vadd.f32 %v1071, %v1003
  %v1073 = vadd.f32 %v1072, %v1004
  %1074 = vadd.xlane.f32.xlu0 %v1073
  %v1075 = vpop.xlane.xlu0 %1074
  %v1076 = vadd.f32 %v1005, %v1006
  %v1077 = vadd.f32 %v1076, %v1007
  %v1078 = vadd.f32 %v1077, %v1008
  %1079 = vadd.xlane.f32.xlu0 %v1078
  %v1080 = vpop.xlane.xlu0 %1079
  %v1081 = vadd.f32 %v1009, %v1010
  %v1082 = vadd.f32 %v1081, %v1011
  %v1083 = vadd.f32 %v1082, %v1012
  %1084 = vadd.xlane.f32.xlu0 %v1083
  %v1085 = vpop.xlane.xlu0 %1084
  %v1086 = vadd.f32 %v1013, %v1014
  %v1087 = vadd.f32 %v1086, %v1015
  %v1088 = vadd.f32 %v1087, %v1016
  %1089 = vadd.xlane.f32.xlu0 %v1088
  %v1090 = vpop.xlane.xlu0 %1089
  %v1091 = vadd.f32 %v1017, %v1018
  %v1092 = vadd.f32 %v1091, %v1019
  %v1093 = vadd.f32 %v1092, %v1020
  %1094 = vadd.xlane.f32.xlu0 %v1093
  %v1095 = vpop.xlane.xlu0 %1094
  %v1096 = vadd.f32 %v1021, %v1022
  %v1097 = vadd.f32 %v1096, %v1023
  %v1098 = vadd.f32 %v1097, %v1024
  %1099 = vadd.xlane.f32.xlu0 %v1098
  %v1100 = vpop.xlane.xlu0 %1099
  %v1101 = vadd.f32 %v1025, %v1026
  %v1102 = vadd.f32 %v1101, %v1027
  %v1103 = vadd.f32 %v1102, %v1028
  %1104 = vadd.xlane.f32.xlu0 %v1103
  %v1105 = vpop.xlane.xlu0 %1104
  %v1106 = vadd.f32 %v1029, %v1030
  %v1107 = vadd.f32 %v1106, %v1031
  %v1108 = vadd.f32 %v1107, %v1032
  %1109 = vadd.xlane.f32.xlu0 %v1108
  %v1110 = vpop.xlane.xlu0 %1109
  %v1111 = vadd.f32 %v1033, %v1034
  %v1112 = vadd.f32 %v1111, %v1035
  %v1113 = vadd.f32 %v1112, %v1036
  %1114 = vadd.xlane.f32.xlu0 %v1113
  %v1115 = vpop.xlane.xlu0 %1114
  %v1116 = vadd.f32 %v1037, %v1038
  %v1117 = vadd.f32 %v1116, %v1039
  %v1118 = vadd.f32 %v1117, %v1040
  %1119 = vadd.xlane.f32.xlu0 %v1118
  %v1120 = vpop.xlane.xlu0 %1119
  %v1121 = vadd.f32 %v961, %v1045
  %v1122 = vadd.f32 %v962, %v1050
  %v1123 = vadd.f32 %v963, %v1055
  %v1124 = vadd.f32 %v964, %v1060
  %v1125 = vadd.f32 %v965, %v1065
  %v1126 = vadd.f32 %v966, %v1070
  %v1127 = vadd.f32 %v967, %v1075
  %v1128 = vadd.f32 %v968, %v1080
  %v1129 = vadd.f32 %v969, %v1085
  %v1130 = vadd.f32 %v970, %v1090
  %v1131 = vadd.f32 %v971, %v1095
  %v1132 = vadd.f32 %v972, %v1100
  %v1133 = vadd.f32 %v973, %v1105
  %v1134 = vadd.f32 %v974, %v1110
  %v1135 = vadd.f32 %v975, %v1115
  %v1136 = vadd.f32 %v976, %v1120
  %1137 = vst.msk [vmem:[%s5] sm:$0xff] %vm944, %v1121
  %1138 = vst.msk [vmem:[%s5 + $0x8] sm:$0xff] %vm944, %v1122
  %1139 = vst.msk [vmem:[%s5 + $0x10] sm:$0xff] %vm944, %v1123
  %1140 = vst.msk [vmem:[%s5 + $0x18] sm:$0xff] %vm944, %v1124
  %1141 = vst.msk [vmem:[%s5 + $0x20] sm:$0xff] %vm944, %v1125
  %1142 = vst.msk [vmem:[%s5 + $0x28] sm:$0xff] %vm944, %v1126
  %1143 = vst.msk [vmem:[%s5 + $0x30] sm:$0xff] %vm944, %v1127
  %1144 = vst.msk [vmem:[%s5 + $0x38] sm:$0xff] %vm944, %v1128
  %1145 = vst.msk [vmem:[%s5 + $0x40] sm:$0xff] %vm944, %v1129
  %1146 = vst.msk [vmem:[%s5 + $0x48] sm:$0xff] %vm944, %v1130
  %1147 = vst.msk [vmem:[%s5 + $0x50] sm:$0xff] %vm944, %v1131
  %1148 = vst.msk [vmem:[%s5 + $0x58] sm:$0xff] %vm944, %v1132
  %1149 = vst.msk [vmem:[%s5 + $0x60] sm:$0xff] %vm944, %v1133
  %1150 = vst.msk [vmem:[%s5 + $0x68] sm:$0xff] %vm944, %v1134
  %1151 = vst.msk [vmem:[%s5 + $0x70] sm:$0xff] %vm944, %v1135
  %1152 = vst.msk [vmem:[%s5 + $0x78] sm:$0xff] %vm944, %v1136
  // Predicated region
  $region22: #{tpu_custom_call.1} parent=0 // pred_check
    _
  $region23: #{tpu_custom_call.1} parent=0 // pred_check_branch
    %1154 = sbr.rel (0) target = $region25
  $region24: #{tpu_custom_call.1} parent=0 // pred_region
    _
  $region25: #{tpu_custom_call.1} parent=0 // pred_fallthru
    _
  // Predicated region
  $region26: #{tpu_custom_call.1} parent=0 // pred_check
    _
  $region27: #{tpu_custom_call.1} parent=0 // pred_check_branch
    %1156 = sbr.rel (0) target = $region29
  $region28: #{tpu_custom_call.1} parent=0 // pred_region
    _
  $region29: #{tpu_custom_call.1} parent=0 // pred_fallthru
    _
  // Predicated region
  $region30: #{tpu_custom_call.1} parent=0 // pred_check
    _
  $region31: #{tpu_custom_call.1} parent=0 // pred_check_branch
    %1158 = sbr.rel (0) target = $region33
  $region32: #{tpu_custom_call.1} parent=0 // pred_region
    _
  $region33: #{tpu_custom_call.1} parent=0 // pred_fallthru
    _
  // Predicated region
  $region34: #{tpu_custom_call.1} parent=0 // pred_check
    _
  $region35: #{tpu_custom_call.1} parent=0 // pred_check_branch
    %1160 = sbr.rel (0) target = $region37
  $region36: #{tpu_custom_call.1} parent=0 // pred_region
    _
  $region37: #{tpu_custom_call.1} parent=0 // pred_fallthru
    _

</llo_original>
